<compile_context>
chip_gen: v5e
topology: v5e:2x2
jax: 0.10.0
libtpu: 0.0.40
codegen_flags: <defaults>
</compile_context>

<pallas_src>
import functools
import numpy as np
import jax
import jax.numpy as jnp
from jax.experimental import pallas as pl
from jax.experimental.pallas import tpu as pltpu

_LANE = 128          # vreg lane width
_SUBLANE = 8         # f32 sublane count
_MAX_BATCH_TILE = 512   # per perf review: 512-1024 row tiles hit ~85% of HBM roofline


def _round_up(n, m):
    return ((n + m - 1) // m) * m


def _apply_act(h, act_type):
    if act_type == "relu":
        return jnp.maximum(h, 0.0)
    if act_type == "sigmoid":
        return jax.nn.sigmoid(h)
    if act_type == "elu":
        # alpha = 1.0 (PyTorch default). expm1 on clamped negatives: no overflow.
        return jnp.where(h > 0.0, h, jnp.expm1(jnp.minimum(h, 0.0)))
    # any other act_type -> identity (PyTorch module adds no activation layer)
    return h


# ----------------------------- Pallas kernel --------------------------------
def _decoder_kernel(x_ref, *refs, act_type, n_layers):
    """Whole decoder fused: h = act(...act(act(x @ W0 + b0) @ W1 + b1)...).

    refs = (w0, b0, w1, b1, ..., out).  Weights are bf16, biases f32, all lane-
    padded to 128.  Matmuls run bf16 x bf16 -> f32 accumulate on the MXU; bias add
    and activation stay f32 (VPU/EUP, v5e-safe).  Intermediates stay on-chip for
    the whole stack.
    """
    o_ref = refs[-1]
    h = x_ref[...]                                   # (tb, Din_pad) f32
    for i in range(n_layers):                        # unrolled at trace time
        w = refs[2 * i][...]                         # (Din_pad_i, Dout_pad_i) bf16
        b = refs[2 * i + 1][...]                     # (1, Dout_pad_i) f32
        h = jnp.dot(h.astype(jnp.bfloat16), w,
                    preferred_element_type=jnp.float32) + b
        h = _apply_act(h, act_type)
    o_ref[...] = h.astype(o_ref.dtype)


# ------------------------------- wrapper -------------------------------------
def decoder_forward(x, padded_params, act_type, out_dim, single_buffer_weights=True):
    """x: (B, Din); padded_params: list of (W_pad bf16, b_pad f32); returns (B, out_dim)."""
    B, Din = x.shape
    Din_pad = padded_params[0][0].shape[0]
    Dout_pad = padded_params[-1][0].shape[1]
    n_layers = len(padded_params)

    # --- batch tiling -------------------------------------------------------
    # Multiple of 8 sublanes; tile caps at _MAX_BATCH_TILE rows.  Whenever there
    # are >= 16 rows, force >= 2 grid steps so the "parallel" batch axis really
    # shards across both v7x TensorCores (no-op on single-TC v5e/v6e).
    B8 = _round_up(B, _SUBLANE)
    if B8 >= 2 * _SUBLANE:
        tb = min(_round_up(B8 // 2, _SUBLANE), _MAX_BATCH_TILE)
    else:
        tb = B8
    B_pad = _round_up(B8, tb)

    # --- input padding (only when actually needed; no full zero slab) --------
    x_f32 = x if x.dtype == jnp.float32 else x.astype(jnp.float32)
    if B_pad != B or Din_pad != Din:
        x_in = jnp.pad(x_f32, ((0, B_pad - B), (0, Din_pad - Din)))
    else:
        x_in = x_f32

    # --- block specs ----------------------------------------------------------
    in_specs = [pl.BlockSpec((tb, Din_pad), lambda i: (i, 0))]
    args = [x_in]
    for w, b in padded_params:
        if single_buffer_weights:
            # Grid-invariant operands: single-buffer them (halves resident VMEM).
            in_specs.append(pl.BlockSpec(w.shape, lambda i: (0, 0),
                                         pipeline_mode=pl.Buffered(1)))
            in_specs.append(pl.BlockSpec(b.shape, lambda i: (0, 0),
                                         pipeline_mode=pl.Buffered(1)))
        else:
            in_specs.append(pl.BlockSpec(w.shape, lambda i: (0, 0)))
            in_specs.append(pl.BlockSpec(b.shape, lambda i: (0, 0)))
        args += [w, b]

    # --- explicit VMEM budget (with 2x headroom), clamped to [16 MiB, 64 MiB] ---
    weight_buf = 1 if single_buffer_weights else 2
    w_bytes = sum(int(np.prod(w.shape)) * w.dtype.itemsize
                  + int(np.prod(b.shape)) * b.dtype.itemsize
                  for (w, b) in padded_params) * weight_buf
    max_pad = max([Din_pad] + [w.shape[1] for (w, _) in padded_params])
    io_bytes = 2 * tb * (Din_pad + Dout_pad) * 4     # double-buffered x / out tiles
    act_bytes = 3 * tb * max_pad * 4                 # f32 intermediate + bf16 copy + slack
    vmem_limit = int(min(64 << 20, max(2 * (w_bytes + io_bytes + act_bytes), 16 << 20)))

    kernel = functools.partial(_decoder_kernel, act_type=act_type, n_layers=n_layers)
    out_pad = pl.pallas_call(
        kernel,
        out_shape=jax.ShapeDtypeStruct((B_pad, Dout_pad), jnp.float32),
        grid=(B_pad // tb,),
        in_specs=in_specs,
        out_specs=pl.BlockSpec((tb, Dout_pad), lambda i: (i, 0)),
        compiler_params=pltpu.CompilerParams(
            dimension_semantics=("parallel",),       # batch shards across TCs on v7x
            vmem_limit_bytes=vmem_limit),
    )(*args)
    return out_pad[:B, :out_dim]


decoder_forward_jit = jax.jit(
    decoder_forward,
    static_argnames=("act_type", "out_dim", "single_buffer_weights"))


# ------------------------ parameter initialization --------------------------
def trunc_normal(key, shape, std=0.1, lo=-2.0, hi=2.0):
    # torch.nn.init.trunc_normal_(std=scale) truncates at absolute [-2, 2]
    u = jax.random.truncated_normal(key, lo / std, hi / std, shape, jnp.float32)
    return u * std


def init_decoder_params(key, decoder_widths, scale=0.1):
    """Deterministic params mirroring decoder.__init__ with dist='tn'."""
    params = []
    for i in range(len(decoder_widths) - 1):
        din, dout = decoder_widths[i], decoder_widths[i + 1]
        key, kw, kb = jax.random.split(key, 3)
        w = trunc_normal(kw, (din, dout), std=scale)          # (in, out) layout
        bound = 1.0 / np.sqrt(din)                            # torch Linear bias init
        b = jax.random.uniform(kb, (dout,), jnp.float32, -bound, bound)
        params.append((w, b))
    return params


def pad_params(params):
    """Zero-pad feature dims to multiples of 128; weights stored bf16, biases f32.

    INVARIANT (sigmoid correctness): padded ROWS of every W_pad are exactly zero so
    that junk in padded columns of the previous activation (sigmoid(0)=0.5) is
    multiplied by zero.  Done once, outside the per-call path.
    """
    padded = []
    for w, b in params:
        din, dout = w.shape
        din_p, dout_p = _round_up(din, _LANE), _round_up(dout, _LANE)
        w_p = jnp.zeros((din_p, dout_p), jnp.bfloat16).at[:din, :dout].set(
            w.astype(jnp.bfloat16))
        b_p = jnp.zeros((1, dout_p), jnp.float32).at[0, :dout].set(
            b.astype(jnp.float32))
        padded.append((w_p, b_p))
    return padded


# --------------------------------- main --------------------------------------
if __name__ == "__main__":
    decoder_widths = [32, 64, 16]   # latent 32 -> hidden 64 -> output 16
    act_type = "relu"
    batch = 8

    key = jax.random.PRNGKey(0)
    kx, kp = jax.random.split(key)
    x = jax.random.normal(kx, (batch, decoder_widths[0]), jnp.float32)
    params = init_decoder_params(kp, decoder_widths, scale=0.1)
    padded = pad_params(params)

    def run(single_buffer):
        return decoder_forward_jit(x, padded, act_type=act_type,
                                   out_dim=decoder_widths[-1],
                                   single_buffer_weights=single_buffer)

    try:
        out = jax.block_until_ready(run(True))
    except Exception:
        # Graceful degradation on JAX versions without BlockSpec pipeline_mode /
        # pl.Buffered support: identical kernel, default double-buffered weights.
        out = jax.block_until_ready(run(False))

    # pure-JAX references on the UNpadded params
    def ref_forward(xv, prms, bf16):
        h = xv.astype(jnp.float32)
        for (w, b) in prms:
            if bf16:   # same cast points as the kernel -> tight tolerance
                h = jnp.dot(h.astype(jnp.bfloat16), w.astype(jnp.bfloat16),
                            preferred_element_type=jnp.float32) + b[None, :]
            else:
                h = h @ w + b[None, :]
            h = _apply_act(h, act_type)
        return h

    ref_bf16 = ref_forward(x, params, bf16=True)
    ref_f32 = ref_forward(x, params, bf16=False)

    assert out.shape == (batch, decoder_widths[-1])
    assert jnp.allclose(out, ref_bf16, atol=1e-4, rtol=1e-4), (
        float(jnp.max(jnp.abs(out - ref_bf16))))
    assert jnp.allclose(out, ref_f32, atol=3e-2, rtol=3e-2), (
        float(jnp.max(jnp.abs(out - ref_f32))))

    print("KERNEL_OK")
</pallas_src>

<mosaic_0001>
module attributes {stable_mosaic.version = 11 : i64} {
  func.func @_decoder_kernel(%arg0: i32, %arg1: memref<8x128xf32, #tpu.memory_space<vmem>>, %arg2: memref<128x128xbf16, #tpu.memory_space<vmem>>, %arg3: memref<1x128xf32, #tpu.memory_space<vmem>>, %arg4: memref<128x128xbf16, #tpu.memory_space<vmem>>, %arg5: memref<1x128xf32, #tpu.memory_space<vmem>>, %arg6: memref<8x128xf32, #tpu.memory_space<vmem>>) attributes {dimension_semantics = [#tpu.dimension_semantics<parallel>], iteration_bounds = array<i64: 1>, scalar_prefetch = 0 : i64, scratch_operands = 0 : i64, tpu.core_type = #tpu.core_type<tc>, window_params = [{transform_indices = @transform_0, window_bounds = array<i64: 8, 128>}, {pipeline_mode = #tpu.pipeline_mode<synchronous>, transform_indices = @transform_1, window_bounds = array<i64: 128, 128>}, {pipeline_mode = #tpu.pipeline_mode<synchronous>, transform_indices = @transform_2, window_bounds = array<i64: 1, 128>}, {pipeline_mode = #tpu.pipeline_mode<synchronous>, transform_indices = @transform_3, window_bounds = array<i64: 128, 128>}, {pipeline_mode = #tpu.pipeline_mode<synchronous>, transform_indices = @transform_4, window_bounds = array<i64: 1, 128>}, {transform_indices = @transform_5, window_bounds = array<i64: 8, 128>}]} {
    %c0 = arith.constant 0 : index
    %c0_0 = arith.constant 0 : index
    %0 = vector.load %arg1[%c0, %c0_0] : memref<8x128xf32, #tpu.memory_space<vmem>>, vector<8x128xf32>
    %c0_1 = arith.constant 0 : index
    %c0_2 = arith.constant 0 : index
    %1 = vector.load %arg2[%c0_1, %c0_2] : memref<128x128xbf16, #tpu.memory_space<vmem>>, vector<128x128xbf16>
    %c0_3 = arith.constant 0 : index
    %c0_4 = arith.constant 0 : index
    %2 = vector.load %arg3[%c0_3, %c0_4] : memref<1x128xf32, #tpu.memory_space<vmem>>, vector<1x128xf32>
    %3 = arith.truncf %0 : vector<8x128xf32> to vector<8x128xbf16>
    %cst = arith.constant dense<0.000000e+00> : vector<8x128xf32>
    %4 = tpu.matmul %3, %1, %cst {dimension_numbers = #tpu.dot_dimension_numbers<[1], [0], [0], [1], [0, 0, 1, 1], [], []>} : vector<8x128xbf16>, vector<128x128xbf16>, vector<8x128xf32> -> vector<8x128xf32>
    %5 = vector.broadcast %2 : vector<1x128xf32> to vector<8x128xf32>
    %6 = arith.addf %4, %5 : vector<8x128xf32>
    %cst_5 = arith.constant 0.000000e+00 : f32
    %7 = vector.broadcast %cst_5 : f32 to vector<8x128xf32>
    %8 = arith.maximumf %6, %7 : vector<8x128xf32>
    %c0_6 = arith.constant 0 : index
    %c0_7 = arith.constant 0 : index
    %9 = vector.load %arg4[%c0_6, %c0_7] : memref<128x128xbf16, #tpu.memory_space<vmem>>, vector<128x128xbf16>
    %c0_8 = arith.constant 0 : index
    %c0_9 = arith.constant 0 : index
    %10 = vector.load %arg5[%c0_8, %c0_9] : memref<1x128xf32, #tpu.memory_space<vmem>>, vector<1x128xf32>
    %11 = arith.truncf %8 : vector<8x128xf32> to vector<8x128xbf16>
    %cst_10 = arith.constant dense<0.000000e+00> : vector<8x128xf32>
    %12 = tpu.matmul %11, %9, %cst_10 {dimension_numbers = #tpu.dot_dimension_numbers<[1], [0], [0], [1], [0, 0, 1, 1], [], []>} : vector<8x128xbf16>, vector<128x128xbf16>, vector<8x128xf32> -> vector<8x128xf32>
    %13 = vector.broadcast %10 : vector<1x128xf32> to vector<8x128xf32>
    %14 = arith.addf %12, %13 : vector<8x128xf32>
    %cst_11 = arith.constant 0.000000e+00 : f32
    %15 = vector.broadcast %cst_11 : f32 to vector<8x128xf32>
    %16 = arith.maximumf %14, %15 : vector<8x128xf32>
    %c0_12 = arith.constant 0 : index
    %c0_13 = arith.constant 0 : index
    %17 = vector.load %arg6[%c0_12, %c0_13] : memref<8x128xf32, #tpu.memory_space<vmem>>, vector<8x128xf32>
    tpu.vector_store %arg6[%c0_12, %c0_13], %16 {strides = array<i32>} : memref<8x128xf32, #tpu.memory_space<vmem>>, vector<8x128xf32>,
    return
  }
  func.func @transform_0(%arg0: i32) -> (i32, i32) {
    %c0_i32 = arith.constant 0 : i32
    %c0_i32_0 = arith.constant 0 : i32
    return %arg0, %c0_i32 : i32, i32
  }
  func.func @transform_1(%arg0: i32) -> (i32, i32) {
    %c0_i32 = arith.constant 0 : i32
    %c0_i32_0 = arith.constant 0 : i32
    %c0_i32_1 = arith.constant 0 : i32
    return %c0_i32, %c0_i32_0 : i32, i32
  }
  func.func @transform_2(%arg0: i32) -> (i32, i32) {
    %c0_i32 = arith.constant 0 : i32
    %c0_i32_0 = arith.constant 0 : i32
    %c0_i32_1 = arith.constant 0 : i32
    return %c0_i32, %c0_i32_0 : i32, i32
  }
  func.func @transform_3(%arg0: i32) -> (i32, i32) {
    %c0_i32 = arith.constant 0 : i32
    %c0_i32_0 = arith.constant 0 : i32
    %c0_i32_1 = arith.constant 0 : i32
    return %c0_i32, %c0_i32_0 : i32, i32
  }
  func.func @transform_4(%arg0: i32) -> (i32, i32) {
    %c0_i32 = arith.constant 0 : i32
    %c0_i32_0 = arith.constant 0 : i32
    %c0_i32_1 = arith.constant 0 : i32
    return %c0_i32, %c0_i32_0 : i32, i32
  }
  func.func @transform_5(%arg0: i32) -> (i32, i32) {
    %c0_i32 = arith.constant 0 : i32
    %c0_i32_0 = arith.constant 0 : i32
    return %arg0, %c0_i32 : i32, i32
  }
}

module attributes {stable_mosaic.version = 11 : i64} {
  func.func @_decoder_kernel(%arg0: i32, %arg1: memref<8x128xf32, #tpu.memory_space<vmem>>, %arg2: memref<128x128xbf16, #tpu.memory_space<vmem>>, %arg3: memref<1x128xf32, #tpu.memory_space<vmem>>, %arg4: memref<128x128xbf16, #tpu.memory_space<vmem>>, %arg5: memref<1x128xf32, #tpu.memory_space<vmem>>, %arg6: memref<8x128xf32, #tpu.memory_space<vmem>>) attributes {dimension_semantics = [#tpu.dimension_semantics<parallel>], iteration_bounds = array<i64: 1>, scalar_prefetch = 0 : i64, scratch_operands = 0 : i64, tpu.core_type = #tpu.core_type<tc>, window_params = [{transform_indices = @transform_0, window_bounds = array<i64: 8, 128>}, {pipeline_mode = #tpu.pipeline_mode<synchronous>, transform_indices = @transform_1, window_bounds = array<i64: 128, 128>}, {pipeline_mode = #tpu.pipeline_mode<synchronous>, transform_indices = @transform_2, window_bounds = array<i64: 1, 128>}, {pipeline_mode = #tpu.pipeline_mode<synchronous>, transform_indices = @transform_3, window_bounds = array<i64: 128, 128>}, {pipeline_mode = #tpu.pipeline_mode<synchronous>, transform_indices = @transform_4, window_bounds = array<i64: 1, 128>}, {transform_indices = @transform_5, window_bounds = array<i64: 8, 128>}]} {
    %c0 = arith.constant 0 : index
    %c0_0 = arith.constant 0 : index
    %0 = vector.load %arg1[%c0, %c0_0] : memref<8x128xf32, #tpu.memory_space<vmem>>, vector<8x128xf32>
    %c0_1 = arith.constant 0 : index
    %c0_2 = arith.constant 0 : index
    %1 = vector.load %arg2[%c0_1, %c0_2] : memref<128x128xbf16, #tpu.memory_space<vmem>>, vector<128x128xbf16>
    %c0_3 = arith.constant 0 : index
    %c0_4 = arith.constant 0 : index
    %2 = vector.load %arg3[%c0_3, %c0_4] : memref<1x128xf32, #tpu.memory_space<vmem>>, vector<1x128xf32>
    %3 = arith.truncf %0 : vector<8x128xf32> to vector<8x128xbf16>
    %cst = arith.constant dense<0.000000e+00> : vector<8x128xf32>
    %4 = tpu.matmul %3, %1, %cst {dimension_numbers = #tpu.dot_dimension_numbers<[1], [0], [0], [1], [0, 0, 1, 1], [], []>} : vector<8x128xbf16>, vector<128x128xbf16>, vector<8x128xf32> -> vector<8x128xf32>
    %5 = vector.broadcast %2 : vector<1x128xf32> to vector<8x128xf32>
    %6 = arith.addf %4, %5 : vector<8x128xf32>
    %cst_5 = arith.constant 0.000000e+00 : f32
    %7 = vector.broadcast %cst_5 : f32 to vector<8x128xf32>
    %8 = arith.maximumf %6, %7 : vector<8x128xf32>
    %c0_6 = arith.constant 0 : index
    %c0_7 = arith.constant 0 : index
    %9 = vector.load %arg4[%c0_6, %c0_7] : memref<128x128xbf16, #tpu.memory_space<vmem>>, vector<128x128xbf16>
    %c0_8 = arith.constant 0 : index
    %c0_9 = arith.constant 0 : index
    %10 = vector.load %arg5[%c0_8, %c0_9] : memref<1x128xf32, #tpu.memory_space<vmem>>, vector<1x128xf32>
    %11 = arith.truncf %8 : vector<8x128xf32> to vector<8x128xbf16>
    %cst_10 = arith.constant dense<0.000000e+00> : vector<8x128xf32>
    %12 = tpu.matmul %11, %9, %cst_10 {dimension_numbers = #tpu.dot_dimension_numbers<[1], [0], [0], [1], [0, 0, 1, 1], [], []>} : vector<8x128xbf16>, vector<128x128xbf16>, vector<8x128xf32> -> vector<8x128xf32>
    %13 = vector.broadcast %10 : vector<1x128xf32> to vector<8x128xf32>
    %14 = arith.addf %12, %13 : vector<8x128xf32>
    %cst_11 = arith.constant 0.000000e+00 : f32
    %15 = vector.broadcast %cst_11 : f32 to vector<8x128xf32>
    %16 = arith.maximumf %14, %15 : vector<8x128xf32>
    %c0_12 = arith.constant 0 : index
    %c0_13 = arith.constant 0 : index
    %17 = vector.load %arg6[%c0_12, %c0_13] : memref<8x128xf32, #tpu.memory_space<vmem>>, vector<8x128xf32>
    tpu.vector_store %arg6[%c0_12, %c0_13], %16 {strides = array<i32>} : memref<8x128xf32, #tpu.memory_space<vmem>>, vector<8x128xf32>,
    return
  }
  func.func @transform_0(%arg0: i32) -> (i32, i32) {
    %c0_i32 = arith.constant 0 : i32
    %c0_i32_0 = arith.constant 0 : i32
    return %arg0, %c0_i32 : i32, i32
  }
  func.func @transform_1(%arg0: i32) -> (i32, i32) {
    %c0_i32 = arith.constant 0 : i32
    %c0_i32_0 = arith.constant 0 : i32
    %c0_i32_1 = arith.constant 0 : i32
    return %c0_i32, %c0_i32_0 : i32, i32
  }
  func.func @transform_2(%arg0: i32) -> (i32, i32) {
    %c0_i32 = arith.constant 0 : i32
    %c0_i32_0 = arith.constant 0 : i32
    %c0_i32_1 = arith.constant 0 : i32
    return %c0_i32, %c0_i32_0 : i32, i32
  }
  func.func @transform_3(%arg0: i32) -> (i32, i32) {
    %c0_i32 = arith.constant 0 : i32
    %c0_i32_0 = arith.constant 0 : i32
    %c0_i32_1 = arith.constant 0 : i32
    return %c0_i32, %c0_i32_0 : i32, i32
  }
  func.func @transform_4(%arg0: i32) -> (i32, i32) {
    %c0_i32 = arith.constant 0 : i32
    %c0_i32_0 = arith.constant 0 : i32
    %c0_i32_1 = arith.constant 0 : i32
    return %c0_i32, %c0_i32_0 : i32, i32
  }
  func.func @transform_5(%arg0: i32) -> (i32, i32) {
    %c0_i32 = arith.constant 0 : i32
    %c0_i32_0 = arith.constant 0 : i32
    return %arg0, %c0_i32 : i32, i32
  }
}

</mosaic_0001>

<llo_original>
// kernel: decoder_forward.1
$region0: #{decoder_forward.1}
  #allocation0 [shape = 'u32[]', space=smem, size = 0x4, offset = 0x4, fixed_abs, tag = 'smem constant byte address 0x4 - core index']
  #allocation1 [shape = 'u32[72,128]{1,0:T(1,128)}', space=vmem, size = 0x9000, scoped, tag = 'internal scratch']
  %s0 = inlined_call_operand.vmem [shape: f32[8,128], index: 0, kind: input, shape index: {}]
  %s1 = inlined_call_operand.hbm [shape: bf16[128,128], index: 1, kind: input, shape index: {}]
  %s2 = inlined_call_operand.vmem [shape: f32[1,128], index: 2, kind: input, shape index: {}]
  %s3 = inlined_call_operand.hbm [shape: bf16[128,128], index: 3, kind: input, shape index: {}]
  %s4 = inlined_call_operand.vmem [shape: f32[1,128], index: 4, kind: input, shape index: {}]
  %s5 = inlined_call_operand.hbm [shape: f32[8,128], index: 5, kind: output, shape index: {}]
  %s6 = sld [smem:[#allocation0]]
  $region38: #{decoder_forward.1} parent=0
    _
  %s8 = ssub.s32 1, %s6
  %s9 = scalar_select 0, %s8, %s6
  $region1: #{decoder_forward.1} parent=0
    #allocation2 [shape = 'u8[32768]{0}', space=vmem, size = 0x8000, scoped, tag = 'input window, operand 1, single buffered']
    #allocation3 [shape = 's32[1]{0}', space=sflag, size = 0x4, scoped, tag = 'scoped memory for decoder_forward.1']
    #allocation4 [shape = 's32[1]{0}', space=sflag, size = 0x4, scoped, tag = 'scoped memory for decoder_forward.1']
    #allocation5 [shape = 'u8[32768]{0}', space=vmem, size = 0x8000, scoped, tag = 'input window, operand 3, single buffered']
    #allocation6 [shape = 's32[1]{0}', space=sflag, size = 0x4, scoped, tag = 'scoped memory for decoder_forward.1']
    #allocation7 [shape = 'u8[4096]{0}', space=vmem, size = 0x1000, scoped, tag = 'output window, operand 0, single buffered']
    %10 = vsyncpa [#allocation3], 0
    %11 = vsyncpa [#allocation6], 0
    %12 = vsyncpa [#allocation4], 0
    // Predicated region
    $region2: #{decoder_forward.1} parent=1 // pred_check
      _
    $region3: #{decoder_forward.1} parent=1 // pred_check_branch
      %14 = sbr.rel (0) target = $region5
    $region4: #{decoder_forward.1} parent=1 // pred_region
      _
    $region5: #{decoder_forward.1} parent=1 // pred_fallthru
      _
    // Predicated region
    $region6: #{decoder_forward.1} parent=1 // pred_check
      _
    $region7: #{decoder_forward.1} parent=1 // pred_check_branch
      %16 = sbr.rel (0) target = $region9
    $region8: #{decoder_forward.1} parent=1 // pred_region
      %18 = vsyncadd [#allocation3], 0
      %s19 = sshll.u32 %s1, 4
      %s20 = int_to_ptr.hbm [resolvable:$true] %s19
      %s21 = sshll.u32 [#allocation2], 4
      %s22 = int_to_ptr.vmem [resolvable:$true] %s21
      %27 = dma.hbm_to_vmem [thread:$0]  %s20, 1024, %s22, [#allocation3], 64, 64, 4
    $region9: #{decoder_forward.1} parent=1 // pred_fallthru
      _
    // Predicated region
    $region10: #{decoder_forward.1} parent=1 // pred_check
      _
    $region11: #{decoder_forward.1} parent=1 // pred_check_branch
      %29 = sbr.rel (0) target = $region13
    $region12: #{decoder_forward.1} parent=1 // pred_region
      _
    $region13: #{decoder_forward.1} parent=1 // pred_fallthru
      _
    // Predicated region
    $region14: #{decoder_forward.1} parent=1 // pred_check
      _
    $region15: #{decoder_forward.1} parent=1 // pred_check_branch
      %31 = sbr.rel (0) target = $region17
    $region16: #{decoder_forward.1} parent=1 // pred_region
      %33 = vsyncadd [#allocation6], 0
      %s34 = sshll.u32 %s3, 4
      %s35 = int_to_ptr.hbm [resolvable:$true] %s34
      %s36 = sshll.u32 [#allocation5], 4
      %s37 = int_to_ptr.vmem [resolvable:$true] %s36
      %42 = dma.hbm_to_vmem [thread:$0]  %s35, 1024, %s37, [#allocation6], 64, 64, 4
    $region17: #{decoder_forward.1} parent=1 // pred_fallthru
      _
    // Predicated region
    $region18: #{decoder_forward.1} parent=1 // pred_check
      _
    $region19: #{decoder_forward.1} parent=1 // pred_check_branch
      %44 = sbr.rel (0) target = $region21
    $region20: #{decoder_forward.1} parent=1 // pred_region
      _
    $region21: #{decoder_forward.1} parent=1 // pred_fallthru
      _
    // Predicated region
    $region22: #{decoder_forward.1} parent=1 // pred_check
      _
    $region23: #{decoder_forward.1} parent=1 // pred_check_branch
      %46 = sbr.rel (0) target = $region25
    $region24: #{decoder_forward.1} parent=1 // pred_region
      %48 = dma.done [#allocation3], 1024
    $region25: #{decoder_forward.1} parent=1 // pred_fallthru
      _
    // Predicated region
    $region26: #{decoder_forward.1} parent=1 // pred_check
      _
    $region27: #{decoder_forward.1} parent=1 // pred_check_branch
      %50 = sbr.rel (0) target = $region29
    $region28: #{decoder_forward.1} parent=1 // pred_region
      %52 = dma.done [#allocation6], 1024
    $region29: #{decoder_forward.1} parent=1 // pred_fallthru
      _
    %v53 = vld [vmem:[%s0] sm:$0xff]
    %v54 = vld [vmem:[#allocation2] sm:$0xf]
    %v55 = vld [vmem:[#allocation2 + $0x4] sm:$0xf]
    %v56 = vld [vmem:[#allocation2 + $0x8] sm:$0xf]
    %v57 = vld [vmem:[#allocation2 + $0xc] sm:$0xf]
    %v58 = vld [vmem:[#allocation2 + $0x10] sm:$0xf]
    %v59 = vld [vmem:[#allocation2 + $0x14] sm:$0xf]
    %v60 = vld [vmem:[#allocation2 + $0x18] sm:$0xf]
    %v61 = vld [vmem:[#allocation2 + $0x1c] sm:$0xf]
    %v62 = vld [vmem:[#allocation2 + $0x20] sm:$0xf]
    %v63 = vld [vmem:[#allocation2 + $0x24] sm:$0xf]
    %v64 = vld [vmem:[#allocation2 + $0x28] sm:$0xf]
    %v65 = vld [vmem:[#allocation2 + $0x2c] sm:$0xf]
    %v66 = vld [vmem:[#allocation2 + $0x30] sm:$0xf]
    %v67 = vld [vmem:[#allocation2 + $0x34] sm:$0xf]
    %v68 = vld [vmem:[#allocation2 + $0x38] sm:$0xf]
    %v69 = vld [vmem:[#allocation2 + $0x3c] sm:$0xf]
    %v70 = vld [vmem:[%s2] sm:$0x1]
    %v71 = vpack.c.bf16 %v53, %v53
    %v73 = vperm.slane %v70, 0
    %v91 = vunpack.c.l.b16 %v54
    %v92 = vunpack.c.l.b16 %v55
    %v93 = vunpack.c.l.b16 %v56
    %v94 = vunpack.c.l.b16 %v57
    %v95 = vunpack.c.l.b16 %v58
    %v96 = vunpack.c.l.b16 %v59
    %v97 = vunpack.c.l.b16 %v60
    %v98 = vunpack.c.l.b16 %v61
    %v99 = vunpack.c.l.b16 %v62
    %v100 = vunpack.c.l.b16 %v63
    %v101 = vunpack.c.l.b16 %v64
    %v102 = vunpack.c.l.b16 %v65
    %v103 = vunpack.c.l.b16 %v66
    %v104 = vunpack.c.l.b16 %v67
    %v105 = vunpack.c.l.b16 %v68
    %v106 = vunpack.c.l.b16 %v69
    %v107 = vpack.c.b16 %v92, %v91
    %v108 = vpack.c.b16 %v94, %v93
    %v109 = vpack.c.b16 %v96, %v95
    %v110 = vpack.c.b16 %v98, %v97
    %v111 = vpack.c.b16 %v100, %v99
    %v112 = vpack.c.b16 %v102, %v101
    %v113 = vpack.c.b16 %v104, %v103
    %v114 = vpack.c.b16 %v106, %v105
    %123 = vmatpush.bf16.msra.mxu0 %v114
    %124 = vmatpush.bf16.msra.mxu0 %v113
    %125 = vmatpush.bf16.msra.mxu0 %v112
    %126 = vmatpush.bf16.msra.mxu0 %v111
    %127 = vmatpush.bf16.msra.mxu0 %v110
    %128 = vmatpush.bf16.msra.mxu0 %v109
    %129 = vmatpush.bf16.msra.mxu0 %v108
    %130 = vmatpush.bf16.msra.mxu0 %v107
    %131 = vmatmul.bf16.gmra.mxu0 %v71
    %v132 = vpop.f32.mrf.mxu0
    %v133 = vadd.f32 %v73, %v132
    %v134 = vpop.f32.mrf.mxu0
    %135 = vdwg.mxu0
    %v136 = vmax.f32 %v133, 0.0
    %v137 = vld [vmem:[#allocation5] sm:$0xf]
    %v138 = vld [vmem:[#allocation5 + $0x4] sm:$0xf]
    %v139 = vld [vmem:[#allocation5 + $0x8] sm:$0xf]
    %v140 = vld [vmem:[#allocation5 + $0xc] sm:$0xf]
    %v141 = vld [vmem:[#allocation5 + $0x10] sm:$0xf]
    %v142 = vld [vmem:[#allocation5 + $0x14] sm:$0xf]
    %v143 = vld [vmem:[#allocation5 + $0x18] sm:$0xf]
    %v144 = vld [vmem:[#allocation5 + $0x1c] sm:$0xf]
    %v145 = vld [vmem:[#allocation5 + $0x20] sm:$0xf]
    %v146 = vld [vmem:[#allocation5 + $0x24] sm:$0xf]
    %v147 = vld [vmem:[#allocation5 + $0x28] sm:$0xf]
    %v148 = vld [vmem:[#allocation5 + $0x2c] sm:$0xf]
    %v149 = vld [vmem:[#allocation5 + $0x30] sm:$0xf]
    %v150 = vld [vmem:[#allocation5 + $0x34] sm:$0xf]
    %v151 = vld [vmem:[#allocation5 + $0x38] sm:$0xf]
    %v152 = vld [vmem:[#allocation5 + $0x3c] sm:$0xf]
    %v153 = vld [vmem:[%s4] sm:$0x1]
    %v154 = vpack.c.bf16 %v136, %v136
    %v156 = vperm.slane %v153, 0
    %v174 = vunpack.c.l.b16 %v137
    %v175 = vunpack.c.l.b16 %v138
    %v176 = vunpack.c.l.b16 %v139
    %v177 = vunpack.c.l.b16 %v140
    %v178 = vunpack.c.l.b16 %v141
    %v179 = vunpack.c.l.b16 %v142
    %v180 = vunpack.c.l.b16 %v143
    %v181 = vunpack.c.l.b16 %v144
    %v182 = vunpack.c.l.b16 %v145
    %v183 = vunpack.c.l.b16 %v146
    %v184 = vunpack.c.l.b16 %v147
    %v185 = vunpack.c.l.b16 %v148
    %v186 = vunpack.c.l.b16 %v149
    %v187 = vunpack.c.l.b16 %v150
    %v188 = vunpack.c.l.b16 %v151
    %v189 = vunpack.c.l.b16 %v152
    %v190 = vpack.c.b16 %v175, %v174
    %v191 = vpack.c.b16 %v177, %v176
    %v192 = vpack.c.b16 %v179, %v178
    %v193 = vpack.c.b16 %v181, %v180
    %v194 = vpack.c.b16 %v183, %v182
    %v195 = vpack.c.b16 %v185, %v184
    %v196 = vpack.c.b16 %v187, %v186
    %v197 = vpack.c.b16 %v189, %v188
    %206 = vmatpush.bf16.msra.mxu0 %v197
    %207 = vmatpush.bf16.msra.mxu0 %v196
    %208 = vmatpush.bf16.msra.mxu0 %v195
    %209 = vmatpush.bf16.msra.mxu0 %v194
    %210 = vmatpush.bf16.msra.mxu0 %v193
    %211 = vmatpush.bf16.msra.mxu0 %v192
    %212 = vmatpush.bf16.msra.mxu0 %v191
    %213 = vmatpush.bf16.msra.mxu0 %v190
    %214 = vmatmul.bf16.gmra.mxu0 %v154
    %v215 = vpop.f32.mrf.mxu0
    %v216 = vadd.f32 %v156, %v215
    %v217 = vpop.f32.mrf.mxu0
    %218 = vdwg.mxu0
    %v219 = vmax.f32 %v216, 0.0
    %220 = vst [vmem:[#allocation7] sm:$0xff] %v219
    // Predicated region
    $region30: #{decoder_forward.1} parent=1 // pred_check
      _
    $region31: #{decoder_forward.1} parent=1 // pred_check_branch
      %222 = sbr.rel (0) target = $region33
    $region32: #{decoder_forward.1} parent=1 // pred_region
      %224 = vsyncadd [#allocation4], 0
      %s226 = sshll.u32 [#allocation7], 4
      %s227 = int_to_ptr.vmem [resolvable:$true] %s226
      %s228 = sshll.u32 %s5, 4
      %s229 = int_to_ptr.hbm [resolvable:$true] %s228
      %231 = dma.vmem_to_hbm [thread:$0]  %s227, 128, %s229, [#allocation4]
    $region33: #{decoder_forward.1} parent=1 // pred_fallthru
      _
    // Predicated region
    $region34: #{decoder_forward.1} parent=1 // pred_check
      _
    $region35: #{decoder_forward.1} parent=1 // pred_check_branch
      %233 = sbr.rel (0) target = $region37
    $region36: #{decoder_forward.1} parent=1 // pred_region
      %235 = dma.done [#allocation4], 128
    $region37: #{decoder_forward.1} parent=1 // pred_fallthru
      _
    %236 = vsyncpa [#allocation3], 1
    %237 = vsyncpa [#allocation6], 1
    %238 = vsyncpa [#allocation4], 1

// kernel: decoder_forward.1
$region0: #{decoder_forward.1}
  #allocation0 [shape = 'u32[]', space=smem, size = 0x4, offset = 0x4, fixed_abs, tag = 'smem constant byte address 0x4 - core index']
  #allocation1 [shape = 'u32[72,128]{1,0:T(1,128)}', space=vmem, size = 0x9000, scoped, tag = 'internal scratch']
  %s0 = inlined_call_operand.vmem [shape: f32[8,128], index: 0, kind: input, shape index: {}]
  %s1 = inlined_call_operand.hbm [shape: bf16[128,128], index: 1, kind: input, shape index: {}]
  %s2 = inlined_call_operand.vmem [shape: f32[1,128], index: 2, kind: input, shape index: {}]
  %s3 = inlined_call_operand.hbm [shape: bf16[128,128], index: 3, kind: input, shape index: {}]
  %s4 = inlined_call_operand.vmem [shape: f32[1,128], index: 4, kind: input, shape index: {}]
  %s5 = inlined_call_operand.hbm [shape: f32[8,128], index: 5, kind: output, shape index: {}]
  %s6 = sld [smem:[#allocation0]]
  $region38: #{decoder_forward.1} parent=0
    _
  %s8 = ssub.s32 1, %s6
  %s9 = scalar_select 0, %s8, %s6
  $region1: #{decoder_forward.1} parent=0
    #allocation2 [shape = 'u8[32768]{0}', space=vmem, size = 0x8000, scoped, tag = 'input window, operand 1, single buffered']
    #allocation3 [shape = 's32[1]{0}', space=sflag, size = 0x4, scoped, tag = 'scoped memory for decoder_forward.1']
    #allocation4 [shape = 's32[1]{0}', space=sflag, size = 0x4, scoped, tag = 'scoped memory for decoder_forward.1']
    #allocation5 [shape = 'u8[32768]{0}', space=vmem, size = 0x8000, scoped, tag = 'input window, operand 3, single buffered']
    #allocation6 [shape = 's32[1]{0}', space=sflag, size = 0x4, scoped, tag = 'scoped memory for decoder_forward.1']
    #allocation7 [shape = 'u8[4096]{0}', space=vmem, size = 0x1000, scoped, tag = 'output window, operand 0, single buffered']
    %10 = vsyncpa [#allocation3], 0
    %11 = vsyncpa [#allocation6], 0
    %12 = vsyncpa [#allocation4], 0
    // Predicated region
    $region2: #{decoder_forward.1} parent=1 // pred_check
      _
    $region3: #{decoder_forward.1} parent=1 // pred_check_branch
      %14 = sbr.rel (0) target = $region5
    $region4: #{decoder_forward.1} parent=1 // pred_region
      _
    $region5: #{decoder_forward.1} parent=1 // pred_fallthru
      _
    // Predicated region
    $region6: #{decoder_forward.1} parent=1 // pred_check
      _
    $region7: #{decoder_forward.1} parent=1 // pred_check_branch
      %16 = sbr.rel (0) target = $region9
    $region8: #{decoder_forward.1} parent=1 // pred_region
      %18 = vsyncadd [#allocation3], 0
      %s19 = sshll.u32 %s1, 4
      %s20 = int_to_ptr.hbm [resolvable:$true] %s19
      %s21 = sshll.u32 [#allocation2], 4
      %s22 = int_to_ptr.vmem [resolvable:$true] %s21
      %27 = dma.hbm_to_vmem [thread:$0]  %s20, 1024, %s22, [#allocation3], 64, 64, 4
    $region9: #{decoder_forward.1} parent=1 // pred_fallthru
      _
    // Predicated region
    $region10: #{decoder_forward.1} parent=1 // pred_check
      _
    $region11: #{decoder_forward.1} parent=1 // pred_check_branch
      %29 = sbr.rel (0) target = $region13
    $region12: #{decoder_forward.1} parent=1 // pred_region
      _
    $region13: #{decoder_forward.1} parent=1 // pred_fallthru
      _
    // Predicated region
    $region14: #{decoder_forward.1} parent=1 // pred_check
      _
    $region15: #{decoder_forward.1} parent=1 // pred_check_branch
      %31 = sbr.rel (0) target = $region17
    $region16: #{decoder_forward.1} parent=1 // pred_region
      %33 = vsyncadd [#allocation6], 0
      %s34 = sshll.u32 %s3, 4
      %s35 = int_to_ptr.hbm [resolvable:$true] %s34
      %s36 = sshll.u32 [#allocation5], 4
      %s37 = int_to_ptr.vmem [resolvable:$true] %s36
      %42 = dma.hbm_to_vmem [thread:$0]  %s35, 1024, %s37, [#allocation6], 64, 64, 4
    $region17: #{decoder_forward.1} parent=1 // pred_fallthru
      _
    // Predicated region
    $region18: #{decoder_forward.1} parent=1 // pred_check
      _
    $region19: #{decoder_forward.1} parent=1 // pred_check_branch
      %44 = sbr.rel (0) target = $region21
    $region20: #{decoder_forward.1} parent=1 // pred_region
      _
    $region21: #{decoder_forward.1} parent=1 // pred_fallthru
      _
    // Predicated region
    $region22: #{decoder_forward.1} parent=1 // pred_check
      _
    $region23: #{decoder_forward.1} parent=1 // pred_check_branch
      %46 = sbr.rel (0) target = $region25
    $region24: #{decoder_forward.1} parent=1 // pred_region
      %48 = dma.done [#allocation3], 1024
    $region25: #{decoder_forward.1} parent=1 // pred_fallthru
      _
    // Predicated region
    $region26: #{decoder_forward.1} parent=1 // pred_check
      _
    $region27: #{decoder_forward.1} parent=1 // pred_check_branch
      %50 = sbr.rel (0) target = $region29
    $region28: #{decoder_forward.1} parent=1 // pred_region
      %52 = dma.done [#allocation6], 1024
    $region29: #{decoder_forward.1} parent=1 // pred_fallthru
      _
    %v53 = vld [vmem:[%s0] sm:$0xff]
    %v54 = vld [vmem:[#allocation2] sm:$0xf]
    %v55 = vld [vmem:[#allocation2 + $0x4] sm:$0xf]
    %v56 = vld [vmem:[#allocation2 + $0x8] sm:$0xf]
    %v57 = vld [vmem:[#allocation2 + $0xc] sm:$0xf]
    %v58 = vld [vmem:[#allocation2 + $0x10] sm:$0xf]
    %v59 = vld [vmem:[#allocation2 + $0x14] sm:$0xf]
    %v60 = vld [vmem:[#allocation2 + $0x18] sm:$0xf]
    %v61 = vld [vmem:[#allocation2 + $0x1c] sm:$0xf]
    %v62 = vld [vmem:[#allocation2 + $0x20] sm:$0xf]
    %v63 = vld [vmem:[#allocation2 + $0x24] sm:$0xf]
    %v64 = vld [vmem:[#allocation2 + $0x28] sm:$0xf]
    %v65 = vld [vmem:[#allocation2 + $0x2c] sm:$0xf]
    %v66 = vld [vmem:[#allocation2 + $0x30] sm:$0xf]
    %v67 = vld [vmem:[#allocation2 + $0x34] sm:$0xf]
    %v68 = vld [vmem:[#allocation2 + $0x38] sm:$0xf]
    %v69 = vld [vmem:[#allocation2 + $0x3c] sm:$0xf]
    %v70 = vld [vmem:[%s2] sm:$0x1]
    %v71 = vpack.c.bf16 %v53, %v53
    %v73 = vperm.slane %v70, 0
    %v91 = vunpack.c.l.b16 %v54
    %v92 = vunpack.c.l.b16 %v55
    %v93 = vunpack.c.l.b16 %v56
    %v94 = vunpack.c.l.b16 %v57
    %v95 = vunpack.c.l.b16 %v58
    %v96 = vunpack.c.l.b16 %v59
    %v97 = vunpack.c.l.b16 %v60
    %v98 = vunpack.c.l.b16 %v61
    %v99 = vunpack.c.l.b16 %v62
    %v100 = vunpack.c.l.b16 %v63
    %v101 = vunpack.c.l.b16 %v64
    %v102 = vunpack.c.l.b16 %v65
    %v103 = vunpack.c.l.b16 %v66
    %v104 = vunpack.c.l.b16 %v67
    %v105 = vunpack.c.l.b16 %v68
    %v106 = vunpack.c.l.b16 %v69
    %v107 = vpack.c.b16 %v92, %v91
    %v108 = vpack.c.b16 %v94, %v93
    %v109 = vpack.c.b16 %v96, %v95
    %v110 = vpack.c.b16 %v98, %v97
    %v111 = vpack.c.b16 %v100, %v99
    %v112 = vpack.c.b16 %v102, %v101
    %v113 = vpack.c.b16 %v104, %v103
    %v114 = vpack.c.b16 %v106, %v105
    %123 = vmatpush.bf16.msra.mxu0 %v114
    %124 = vmatpush.bf16.msra.mxu0 %v113
    %125 = vmatpush.bf16.msra.mxu0 %v112
    %126 = vmatpush.bf16.msra.mxu0 %v111
    %127 = vmatpush.bf16.msra.mxu0 %v110
    %128 = vmatpush.bf16.msra.mxu0 %v109
    %129 = vmatpush.bf16.msra.mxu0 %v108
    %130 = vmatpush.bf16.msra.mxu0 %v107
    %131 = vmatmul.bf16.gmra.mxu0 %v71
    %v132 = vpop.f32.mrf.mxu0
    %v133 = vadd.f32 %v73, %v132
    %v134 = vpop.f32.mrf.mxu0
    %135 = vdwg.mxu0
    %v136 = vmax.f32 %v133, 0.0
    %v137 = vld [vmem:[#allocation5] sm:$0xf]
    %v138 = vld [vmem:[#allocation5 + $0x4] sm:$0xf]
    %v139 = vld [vmem:[#allocation5 + $0x8] sm:$0xf]
    %v140 = vld [vmem:[#allocation5 + $0xc] sm:$0xf]
    %v141 = vld [vmem:[#allocation5 + $0x10] sm:$0xf]
    %v142 = vld [vmem:[#allocation5 + $0x14] sm:$0xf]
    %v143 = vld [vmem:[#allocation5 + $0x18] sm:$0xf]
    %v144 = vld [vmem:[#allocation5 + $0x1c] sm:$0xf]
    %v145 = vld [vmem:[#allocation5 + $0x20] sm:$0xf]
    %v146 = vld [vmem:[#allocation5 + $0x24] sm:$0xf]
    %v147 = vld [vmem:[#allocation5 + $0x28] sm:$0xf]
    %v148 = vld [vmem:[#allocation5 + $0x2c] sm:$0xf]
    %v149 = vld [vmem:[#allocation5 + $0x30] sm:$0xf]
    %v150 = vld [vmem:[#allocation5 + $0x34] sm:$0xf]
    %v151 = vld [vmem:[#allocation5 + $0x38] sm:$0xf]
    %v152 = vld [vmem:[#allocation5 + $0x3c] sm:$0xf]
    %v153 = vld [vmem:[%s4] sm:$0x1]
    %v154 = vpack.c.bf16 %v136, %v136
    %v156 = vperm.slane %v153, 0
    %v174 = vunpack.c.l.b16 %v137
    %v175 = vunpack.c.l.b16 %v138
    %v176 = vunpack.c.l.b16 %v139
    %v177 = vunpack.c.l.b16 %v140
    %v178 = vunpack.c.l.b16 %v141
    %v179 = vunpack.c.l.b16 %v142
    %v180 = vunpack.c.l.b16 %v143
    %v181 = vunpack.c.l.b16 %v144
    %v182 = vunpack.c.l.b16 %v145
    %v183 = vunpack.c.l.b16 %v146
    %v184 = vunpack.c.l.b16 %v147
    %v185 = vunpack.c.l.b16 %v148
    %v186 = vunpack.c.l.b16 %v149
    %v187 = vunpack.c.l.b16 %v150
    %v188 = vunpack.c.l.b16 %v151
    %v189 = vunpack.c.l.b16 %v152
    %v190 = vpack.c.b16 %v175, %v174
    %v191 = vpack.c.b16 %v177, %v176
    %v192 = vpack.c.b16 %v179, %v178
    %v193 = vpack.c.b16 %v181, %v180
    %v194 = vpack.c.b16 %v183, %v182
    %v195 = vpack.c.b16 %v185, %v184
    %v196 = vpack.c.b16 %v187, %v186
    %v197 = vpack.c.b16 %v189, %v188
    %206 = vmatpush.bf16.msra.mxu0 %v197
    %207 = vmatpush.bf16.msra.mxu0 %v196
    %208 = vmatpush.bf16.msra.mxu0 %v195
    %209 = vmatpush.bf16.msra.mxu0 %v194
    %210 = vmatpush.bf16.msra.mxu0 %v193
    %211 = vmatpush.bf16.msra.mxu0 %v192
    %212 = vmatpush.bf16.msra.mxu0 %v191
    %213 = vmatpush.bf16.msra.mxu0 %v190
    %214 = vmatmul.bf16.gmra.mxu0 %v154
    %v215 = vpop.f32.mrf.mxu0
    %v216 = vadd.f32 %v156, %v215
    %v217 = vpop.f32.mrf.mxu0
    %218 = vdwg.mxu0
    %v219 = vmax.f32 %v216, 0.0
    %220 = vst [vmem:[#allocation7] sm:$0xff] %v219
    // Predicated region
    $region30: #{decoder_forward.1} parent=1 // pred_check
      _
    $region31: #{decoder_forward.1} parent=1 // pred_check_branch
      %222 = sbr.rel (0) target = $region33
    $region32: #{decoder_forward.1} parent=1 // pred_region
      %224 = vsyncadd [#allocation4], 0
      %s226 = sshll.u32 [#allocation7], 4
      %s227 = int_to_ptr.vmem [resolvable:$true] %s226
      %s228 = sshll.u32 %s5, 4
      %s229 = int_to_ptr.hbm [resolvable:$true] %s228
      %231 = dma.vmem_to_hbm [thread:$0]  %s227, 128, %s229, [#allocation4]
    $region33: #{decoder_forward.1} parent=1 // pred_fallthru
      _
    // Predicated region
    $region34: #{decoder_forward.1} parent=1 // pred_check
      _
    $region35: #{decoder_forward.1} parent=1 // pred_check_branch
      %233 = sbr.rel (0) target = $region37
    $region36: #{decoder_forward.1} parent=1 // pred_region
      %235 = dma.done [#allocation4], 128
    $region37: #{decoder_forward.1} parent=1 // pred_fallthru
      _
    %236 = vsyncpa [#allocation3], 1
    %237 = vsyncpa [#allocation6], 1
    %238 = vsyncpa [#allocation4], 1

</llo_original>
